<compile_context>
chip_gen: v5e
topology: v5e:2x2
jax: 0.10.0
libtpu: 0.0.40
codegen_flags: <defaults>
</compile_context>

<pallas_src>
import jax
import jax.numpy as jnp
from jax.experimental import pallas as pl
from jax.experimental.pallas import tpu as pltpu


# ----------------------------------------------------------------------------
# Kernel 1: feature transform  Z = X @ W  (tiled over node rows)
# ----------------------------------------------------------------------------
def transform_kernel(x_ref, w_ref, z_ref):
    z_ref[...] = jnp.dot(
        x_ref[...], w_ref[...], preferred_element_type=jnp.float32
    ).astype(z_ref.dtype)


def feature_transform(x, w, *, tm):
    N, f_in = x.shape
    f_out = w.shape[1]
    assert N % tm == 0
    return pl.pallas_call(
        transform_kernel,
        out_shape=jax.ShapeDtypeStruct((N, f_out), jnp.bfloat16),
        grid_spec=pltpu.PrefetchScalarGridSpec(
            num_scalar_prefetch=0,
            grid=(N // tm,),
            in_specs=[
                pl.BlockSpec((tm, f_in), lambda i: (i, 0)),
                pl.BlockSpec((f_in, f_out), lambda i: (0, 0)),
            ],
            out_specs=pl.BlockSpec((tm, f_out), lambda i: (i, 0)),
        ),
        compiler_params=pltpu.CompilerParams(dimension_semantics=("parallel",)),
        cost_estimate=pl.CostEstimate(
            flops=2 * N * f_in * f_out,
            transcendentals=0,
            bytes_accessed=x.size * 2 + w.size * 2 + N * f_out * 2,
        ),
    )(x, w)


# ----------------------------------------------------------------------------
# Kernel 2: GCN aggregation + bias + ReLU + next-layer transform
#   out[i] = relu( sum_k Â[i,k] @ Z[k] + b ) @ W_next
# grid = (row tiles "parallel", col tiles "arbitrary" reduction)
# ----------------------------------------------------------------------------
def aggregate_kernel(a_ref, z_ref, b_ref, wn_ref, out_ref, acc_ref):
    k = pl.program_id(1)

    @pl.when(k == 0)
    def _():
        acc_ref[...] = jnp.zeros_like(acc_ref)

    acc_ref[...] += jnp.dot(
        a_ref[...], z_ref[...], preferred_element_type=jnp.float32
    )

    @pl.when(k == pl.num_programs(1) - 1)
    def _():
        h = jnp.maximum(acc_ref[...] + b_ref[...], 0.0)          # bias + ReLU (f32)
        out_ref[...] = jnp.dot(
            h.astype(wn_ref.dtype), wn_ref[...],
            preferred_element_type=jnp.float32,
        ).astype(out_ref.dtype)


def gcn_aggregate(a_hat, z, bias, w_next, *, tm, tk):
    N = a_hat.shape[0]
    f_in = z.shape[1]
    f_out = w_next.shape[1]
    assert N % tm == 0 and N % tk == 0
    flops = 2 * N * N * f_in + 2 * N * f_in * f_out
    bytes_acc = (a_hat.size * 2 + z.size * 2 * (N // tm)
                 + w_next.size * 2 + bias.size * 4 + N * f_out * 2)
    return pl.pallas_call(
        aggregate_kernel,
        out_shape=jax.ShapeDtypeStruct((N, f_out), jnp.bfloat16),
        grid_spec=pltpu.PrefetchScalarGridSpec(
            num_scalar_prefetch=0,
            grid=(N // tm, N // tk),
            in_specs=[
                pl.BlockSpec((tm, tk), lambda i, k: (i, k)),        # Â tile
                pl.BlockSpec((tk, f_in), lambda i, k: (k, 0)),      # Z tile
                pl.BlockSpec((1, f_in), lambda i, k: (0, 0)),       # bias (f32)
                pl.BlockSpec((f_in, f_out), lambda i, k: (0, 0)),   # next-layer W
            ],
            out_specs=pl.BlockSpec((tm, f_out), lambda i, k: (i, 0)),
            scratch_shapes=[pltpu.VMEM((tm, f_in), jnp.float32)],
        ),
        compiler_params=pltpu.CompilerParams(
            dimension_semantics=("parallel", "arbitrary")),
        cost_estimate=pl.CostEstimate(
            flops=flops, transcendentals=0, bytes_accessed=bytes_acc),
    )(a_hat, z, bias, w_next)


# ----------------------------------------------------------------------------
# Kernel 3: pooled layer-3 aggregation + MLP head + sigmoid
#   g = PÂ @ Z3 + b3 ;  y = sigmoid((g @ Wl1 + bl1) @ Wl2 + bl2)
# Everything here is tiny ([G,N] x [N,16]) -> single gridless call.
# ----------------------------------------------------------------------------
def pooled_head_kernel(pa_ref, z3_ref, b3_ref, wl1_ref, bl1_ref,
                       wl2_ref, bl2_ref, o_ref):
    g = jnp.dot(pa_ref[...], z3_ref[...],
                preferred_element_type=jnp.float32) + b3_ref[...]
    g = jnp.dot(g.astype(wl1_ref.dtype), wl1_ref[...],
                preferred_element_type=jnp.float32) + bl1_ref[...]
    g = jnp.dot(g.astype(wl2_ref.dtype), wl2_ref[...],
                preferred_element_type=jnp.float32) + bl2_ref[...]
    o_ref[...] = jax.nn.sigmoid(g)


def pooled_head(pa, z3, b3, wl1, bl1, wl2, bl2):
    G = pa.shape[0]
    C = wl2.shape[1]
    vmem = pl.BlockSpec(memory_space=pltpu.MemorySpace.VMEM)
    return pl.pallas_call(
        pooled_head_kernel,
        out_shape=jax.ShapeDtypeStruct((G, C), jnp.float32),
        in_specs=[vmem] * 7,
        out_specs=vmem,
    )(pa, z3, b3, wl1, bl1, wl2, bl2)


# ----------------------------------------------------------------------------
# Full forward
# ----------------------------------------------------------------------------
def gcn_forward(a_hat, x, params, pool, *, tm=256, tk=256):
    (w1, b1, w2, b2, w3, b3, wl1, bl1, wl2, bl2) = params
    bf16 = jnp.bfloat16

    # bf16 operands (f32 accumulation kept inside the kernels).
    a_bf = a_hat.astype(bf16)
    x_bf = x.astype(bf16)
    pa_bf = (pool @ a_hat).astype(bf16)     # fuse mean-pool into layer-3 agg

    z1 = feature_transform(x_bf, w1.astype(bf16), tm=tm)                 # X @ W1
    z2 = gcn_aggregate(a_bf, z1, b1, w2.astype(bf16), tm=tm, tk=tk)      # relu(Â z1 + b1) W2
    z3 = gcn_aggregate(a_bf, z2, b2, w3.astype(bf16), tm=tm, tk=tk)      # relu(Â z2 + b2) W3
    return pooled_head(pa_bf, z3, b3, wl1.astype(bf16), bl1,
                       wl2.astype(bf16), bl2)


# ----------------------------------------------------------------------------
# Glue: normalized adjacency, pooling matrix, deterministic params, reference
# ----------------------------------------------------------------------------
def build_norm_adj(edge_index, num_nodes):
    """Â = D^{-1/2} (A + I) D^{-1/2} (PyG GCNConv default normalization)."""
    src, dst = edge_index
    a = jnp.zeros((num_nodes, num_nodes), jnp.float32)
    a = a.at[dst, src].set(1.0)
    a = a + jnp.eye(num_nodes, dtype=jnp.float32)
    deg = a.sum(axis=1)
    d_inv_sqrt = jnp.where(deg > 0, 1.0 / jnp.sqrt(deg), 0.0)
    return a * d_inv_sqrt[:, None] * d_inv_sqrt[None, :]


def build_mean_pool(batch, num_graphs):
    """P[g, n] = 1/|nodes in graph g| if batch[n] == g else 0."""
    onehot = (batch[None, :] == jnp.arange(num_graphs)[:, None]).astype(jnp.float32)
    counts = onehot.sum(axis=1, keepdims=True)
    return onehot / jnp.maximum(counts, 1.0)


def init_params(key, output_channels):
    dims = [(100, 42), (42, 24), (24, 16), (16, 10), (10, output_channels)]
    params = []
    for fi, fo in dims:
        key, kw = jax.random.split(key)
        limit = (6.0 / (fi + fo)) ** 0.5
        w = jax.random.uniform(kw, (fi, fo), jnp.float32, -limit, limit)
        b = jnp.zeros((1, fo), jnp.float32)
        params.extend([w, b])
    return tuple(params)


def reference_forward(a_hat, x, params, pool):
    """Plain-JAX f32 reference with the original (unfused) math."""
    (w1, b1, w2, b2, w3, b3, wl1, bl1, wl2, bl2) = params
    h = jnp.maximum(a_hat @ (x @ w1) + b1, 0.0)
    h = jnp.maximum(a_hat @ (h @ w2) + b2, 0.0)
    h = a_hat @ (h @ w3) + b3
    g = pool @ h
    g = g @ wl1 + bl1
    g = g @ wl2 + bl2
    return jax.nn.sigmoid(g)


# ----------------------------------------------------------------------------
if __name__ == "__main__":
    key = jax.random.PRNGKey(0)

    G = 8                   # graphs in the batch
    NODES_PER_GRAPH = 64
    N = G * NODES_PER_GRAPH  # 512 nodes -> MXU-filling 256x256 Â tiles
    F_IN = 100
    OUTPUT_CHANNELS = 12    # tox21 task count

    key, kx = jax.random.split(key)
    x = jax.random.normal(kx, (N, F_IN), jnp.float32)

    # Undirected ring within each graph.
    edges = []
    for g in range(G):
        base = g * NODES_PER_GRAPH
        for i in range(NODES_PER_GRAPH):
            a_node = base + i
            b_node = base + (i + 1) % NODES_PER_GRAPH
            edges.append((a_node, b_node))
            edges.append((b_node, a_node))
    edge_index = jnp.array(edges, dtype=jnp.int32).T                 # [2, E]
    batch = jnp.repeat(jnp.arange(G, dtype=jnp.int32), NODES_PER_GRAPH)

    a_hat = build_norm_adj(edge_index, N)    # [N, N]
    pool = build_mean_pool(batch, G)         # [G, N]
    params = init_params(key, OUTPUT_CHANNELS)

    out = gcn_forward(a_hat, x, params, pool, tm=256, tk=256)
    out = jax.block_until_ready(out)

    ref = reference_forward(a_hat, x, params, pool)
    assert out.shape == (G, OUTPUT_CHANNELS)
    # bf16 operands / f32 accumulation vs pure-f32 reference -> looser tol.
    assert jnp.allclose(out, ref, atol=2e-2, rtol=2e-2), (
        float(jnp.max(jnp.abs(out - ref))))

    print("KERNEL_OK")
</pallas_src>

<mosaic_0001>
module attributes {stable_mosaic.version = 11 : i64} {
  func.func @transform_kernel(%arg0: i32, %arg1: memref<256x100xbf16, #tpu.memory_space<vmem>>, %arg2: memref<100x42xbf16, #tpu.memory_space<vmem>>, %arg3: memref<256x42xbf16, #tpu.memory_space<vmem>>) attributes {dimension_semantics = [#tpu.dimension_semantics<parallel>], iteration_bounds = array<i64: 2>, scalar_prefetch = 0 : i64, scratch_operands = 0 : i64, tpu.core_type = #tpu.core_type<tc>, window_params = [{transform_indices = @transform_0, window_bounds = array<i64: 256, 100>}, {pipeline_mode = #tpu.pipeline_mode<synchronous>, transform_indices = @transform_1, window_bounds = array<i64: 100, 42>}, {transform_indices = @transform_2, window_bounds = array<i64: 256, 42>}]} {
    %c0 = arith.constant 0 : index
    %c0_0 = arith.constant 0 : index
    %0 = vector.load %arg1[%c0, %c0_0] : memref<256x100xbf16, #tpu.memory_space<vmem>>, vector<256x100xbf16>
    %c0_1 = arith.constant 0 : index
    %c0_2 = arith.constant 0 : index
    %1 = vector.load %arg2[%c0_1, %c0_2] : memref<100x42xbf16, #tpu.memory_space<vmem>>, vector<100x42xbf16>
    %cst = arith.constant dense<0.000000e+00> : vector<256x42xf32>
    %2 = tpu.matmul %0, %1, %cst {dimension_numbers = #tpu.dot_dimension_numbers<[1], [0], [0], [1], [0, 0, 1, 1], [], []>} : vector<256x100xbf16>, vector<100x42xbf16>, vector<256x42xf32> -> vector<256x42xf32>
    %3 = arith.truncf %2 : vector<256x42xf32> to vector<256x42xbf16>
    %c0_3 = arith.constant 0 : index
    %c0_4 = arith.constant 0 : index
    %4 = vector.load %arg3[%c0_3, %c0_4] : memref<256x42xbf16, #tpu.memory_space<vmem>>, vector<256x42xbf16>
    tpu.vector_store %arg3[%c0_3, %c0_4], %3 {strides = array<i32>} : memref<256x42xbf16, #tpu.memory_space<vmem>>, vector<256x42xbf16>,
    return
  }
  func.func @transform_0(%arg0: i32) -> (i32, i32) {
    %c0_i32 = arith.constant 0 : i32
    %c0_i32_0 = arith.constant 0 : i32
    return %arg0, %c0_i32 : i32, i32
  }
  func.func @transform_1(%arg0: i32) -> (i32, i32) {
    %c0_i32 = arith.constant 0 : i32
    %c0_i32_0 = arith.constant 0 : i32
    %c0_i32_1 = arith.constant 0 : i32
    return %c0_i32, %c0_i32_0 : i32, i32
  }
  func.func @transform_2(%arg0: i32) -> (i32, i32) {
    %c0_i32 = arith.constant 0 : i32
    %c0_i32_0 = arith.constant 0 : i32
    return %arg0, %c0_i32 : i32, i32
  }
}

</mosaic_0001>

<llo_original>
// kernel: tpu_custom_call.1
$region0: #{tpu_custom_call.1}
  #allocation0 [shape = 'u32[]', space=smem, size = 0x4, offset = 0x4, fixed_abs, tag = 'smem constant byte address 0x4 - core index']
  #allocation1 [shape = 'u32[72,128]{1,0:T(1,128)}', space=vmem, size = 0x9000, scoped, tag = 'internal scratch']
  %s0 = inlined_call_operand.vmem [shape: bf16[512,100], index: 0, kind: input, shape index: {}]
  %s1 = inlined_call_operand.vmem [shape: bf16[100,42], index: 1, kind: input, shape index: {}]
  %s2 = inlined_call_operand.vmem [shape: bf16[512,42], index: 2, kind: output, shape index: {}]
  %s3 = sld [smem:[#allocation0]]
  $region41: #{tpu_custom_call.1} parent=0
    _
  %s5 = ssub.s32 1, %s3
  %s6 = scalar_select 0, %s5, %s3
  loop: start=0, step=1, limit=4
  $region2: #{tpu_custom_call.1} parent=0 // loop_pre_header
    _
  $region3: #{tpu_custom_call.1} parent=0 // loop_header
    %s8 = sphi 0, %s12
    %p9 = scmp.ge.s32.totalorder %s8, 4
    %s18 = sphi 0, %s20
    %s21 = sphi 0, %s18
    %s22 = sphi 0, %s21
    %s38 = sphi 0, %s22
    %s42 = sphi 0, %s42
    %s44 = sphi 0, %s42
    %s45 = sphi 0, %s44
    %s59 = sphi 0, %s45
    %s65 = sphi 0, %s67
    %s68 = sphi 0, %s65
    %s69 = sphi 0, %s68
    %s85 = sphi 0, %s69
  $region4: #{tpu_custom_call.1} parent=0 // loop_header_branch
    %11 = sbr.rel (%p9) target = $region8
  $region5: #{tpu_custom_call.1} parent=0 // loop_body
    %s13 = ssub.s32 %s8, 1
    %s14 = ssub.s32 %s8, 2
    %s15 = sadd.s32 %s8, 1
    %s16 = ssub.s32 %s8, %s15
    %p17 = scmp.eq.s32.totalorder %s16, 0
    %s19 = sadd.s32 %s18, 1
    %s20 = scalar_select %p17, %s18, %s19
    %p23 = pneg %p17
    %p24 = scmp.eq.s32.totalorder %s8, 1
    %p25 = por %p23, %p24
    %p26 = scmp.ne.s32.totalorder %s18, %s21
    %p27 = scmp.eq.s32.totalorder %s8, 0
    %p28 = por %p26, %p27
    %p29 = scmp.ne.s32.totalorder %s18, %s21
    %p30 = scmp.eq.s32.totalorder %s13, 1
    %p31 = por %p29, %p30
    %p32 = scmp.ne.s32.totalorder %s21, %s22
    %p33 = scmp.eq.s32.totalorder %s13, 0
    %p34 = por %p32, %p33
    %p35 = scmp.ne.s32.totalorder %s21, %s22
    %p36 = scmp.eq.s32.totalorder %s14, 1
    %p37 = por %p35, %p36
    %p39 = scmp.ne.s32.totalorder %s22, %s38
    %p40 = scmp.eq.s32.totalorder %s14, 0
    %p41 = por %p39, %p40
    %s43 = sadd.s32 %s42, 1
    %p46 = scmp.eq.s32.totalorder %s8, 1
    %p47 = scmp.ne.s32.totalorder %s42, %s44
    %p48 = scmp.eq.s32.totalorder %s8, 0
    %p49 = por %p47, %p48
    %p50 = scmp.ne.s32.totalorder %s42, %s44
    %p51 = scmp.eq.s32.totalorder %s13, 1
    %p52 = por %p50, %p51
    %p53 = scmp.ne.s32.totalorder %s44, %s45
    %p54 = scmp.eq.s32.totalorder %s13, 0
    %p55 = por %p53, %p54
    %p56 = scmp.ne.s32.totalorder %s44, %s45
    %p57 = scmp.eq.s32.totalorder %s14, 1
    %p58 = por %p56, %p57
    %p60 = scmp.ne.s32.totalorder %s45, %s59
    %p61 = scmp.eq.s32.totalorder %s14, 0
    %p62 = por %p60, %p61
    %s63 = ssub.s32 %s8, %s15
    %p64 = scmp.eq.s32.totalorder %s63, 0
    %s66 = sadd.s32 %s65, 1
    %s67 = scalar_select %p64, %s65, %s66
    %p70 = pneg %p64
    %p71 = scmp.eq.s32.totalorder %s8, 1
    %p72 = por %p70, %p71
    %p73 = scmp.ne.s32.totalorder %s65, %s68
    %p74 = scmp.eq.s32.totalorder %s8, 0
    %p75 = por %p73, %p74
    %p76 = scmp.ne.s32.totalorder %s65, %s68
    %p77 = scmp.eq.s32.totalorder %s13, 1
    %p78 = por %p76, %p77
    %p79 = scmp.ne.s32.totalorder %s68, %s69
    %p80 = scmp.eq.s32.totalorder %s13, 0
    %p81 = por %p79, %p80
    %p82 = scmp.ne.s32.totalorder %s68, %s69
    %p83 = scmp.eq.s32.totalorder %s14, 1
    %p84 = por %p82, %p83
    %p86 = scmp.ne.s32.totalorder %s69, %s85
    %p87 = scmp.eq.s32.totalorder %s14, 0
    %p88 = por %p86, %p87
    %p89 = scmp.le.s32.totalorder 1, %s8
    %p90 = scmp.lt.s32.totalorder %s8, 3
    %p91 = pnand %p89, %p90
    %p92 = pneg %p91
    // Predicated region
    $region9: #{tpu_custom_call.1} parent=5 // pred_check
      _
    $region10: #{tpu_custom_call.1} parent=5 // pred_check_branch
      %94 = sbr.rel (%p91) target = $region12
    $region11: #{tpu_custom_call.1} parent=5 // pred_region
      %s95 = ssub.s32 %s8, 1
      // Predicated region
      $region13: #{tpu_custom_call.1} parent=11 // pred_check
        %p96 = pneg %p55
      $region14: #{tpu_custom_call.1} parent=11 // pred_check_branch
        %98 = sbr.rel (%p96) target = $region16
      $region15: #{tpu_custom_call.1} parent=11 // pred_region
        _
      $region16: #{tpu_custom_call.1} parent=11 // pred_fallthru
        _
    $region12: #{tpu_custom_call.1} parent=5 // pred_fallthru
      _
    %p99 = scmp.lt.s32.totalorder %s8, 2
    // Predicated region
    $region17: #{tpu_custom_call.1} parent=5 // pred_check
      %p100 = pneg %p99
    $region18: #{tpu_custom_call.1} parent=5 // pred_check_branch
      %102 = sbr.rel (%p100) target = $region20
    $region19: #{tpu_custom_call.1} parent=5 // pred_region
      // Predicated region
      $region21: #{tpu_custom_call.1} parent=19 // pred_check
        %p103 = pneg %p28
      $region22: #{tpu_custom_call.1} parent=19 // pred_check_branch
        %105 = sbr.rel (%p103) target = $region24
      $region23: #{tpu_custom_call.1} parent=19 // pred_region
        %s106 = smul.u32 32, %s8
        %p107 = scmp.lt.s32.totalorder %s106, 63
        %s108 = scalar_select %p107, %s106, 63
        %s109 = smul.addr %s108, 4
        %s110 = scalar_lea.vmem %s0, %s109
        %s111 = smul.u32 32, %s8
      $region24: #{tpu_custom_call.1} parent=19 // pred_fallthru
        _
    $region20: #{tpu_custom_call.1} parent=5 // pred_fallthru
      _
    %p112 = scmp.le.s32.totalorder 1, %s8
    %p113 = scmp.lt.s32.totalorder %s8, 3
    %p114 = pnand %p112, %p113
    %p115 = pneg %p114
    // Predicated region
    $region25: #{tpu_custom_call.1} parent=5 // pred_check
      _
    $region26: #{tpu_custom_call.1} parent=5 // pred_check_branch
      %117 = sbr.rel (%p114) target = $region28
    $region27: #{tpu_custom_call.1} parent=5 // pred_region
      %s118 = ssub.s32 %s8, 1
      %s119 = smul.u32 32, %s13
      %p120 = scmp.lt.s32.totalorder %s119, 63
      %s121 = scalar_select %p120, %s119, 63
      %s122 = smul.addr %s121, 4
      %s123 = scalar_lea.vmem %s0, %s122
      %p124 = pneg %p34
      %p125 = pneg %p31
      %p126 = pneg %p55
      %p127 = pneg %p52
      %p128 = pneg %p81
      %p129 = pneg %p78
      %s130 = smul.u32 32, %s13
      %p131 = scmp.lt.s32.totalorder %s130, 63
      %s132 = scalar_select %p131, %s130, 63
      %s133 = smul.addr %s132, 4
      %s134 = scalar_lea.vmem %s2, %s133
      %s135 = smul.u32 32, %s13
      %p136 = scmp.lt.s32.totalorder %s135, 63
      %s137 = scalar_select %p136, %s135, 63
      %s138 = smul.addr %s137, 4
      %s139 = scalar_lea.vmem %s0, %s138
      %s140 = smul.u32 32, %s13
      %s141 = smul.u32 32, %s13
      %p142 = scmp.lt.s32.totalorder %s141, 63
      %s143 = scalar_select %p142, %s141, 63
      %s144 = smul.addr %s143, 4
      %s145 = scalar_lea.vmem %s2, %s144
      %s146 = smul.u32 32, %s13
      %v148 = vld [vmem:[%s139] sm:$0xf]
      %v149 = vld [vmem:[%s139 + $0x4] sm:$0xf]
      %v150 = vld [vmem:[%s139 + $0x8] sm:$0xf]
      %v151 = vld [vmem:[%s139 + $0xc] sm:$0xf]
      %v152 = vld [vmem:[%s139 + $0x10] sm:$0xf]
      %v153 = vld [vmem:[%s139 + $0x14] sm:$0xf]
      %v154 = vld [vmem:[%s139 + $0x18] sm:$0xf]
      %v155 = vld [vmem:[%s139 + $0x1c] sm:$0xf]
      %v156 = vld [vmem:[%s139 + $0x20] sm:$0xf]
      %v157 = vld [vmem:[%s139 + $0x24] sm:$0xf]
      %v158 = vld [vmem:[%s139 + $0x28] sm:$0xf]
      %v159 = vld [vmem:[%s139 + $0x2c] sm:$0xf]
      %v160 = vld [vmem:[%s139 + $0x30] sm:$0xf]
      %v161 = vld [vmem:[%s139 + $0x34] sm:$0xf]
      %v162 = vld [vmem:[%s139 + $0x38] sm:$0xf]
      %v163 = vld [vmem:[%s139 + $0x3c] sm:$0xf]
      %v164 = vld [vmem:[%s139 + $0x40] sm:$0xf]
      %v165 = vld [vmem:[%s139 + $0x44] sm:$0xf]
      %v166 = vld [vmem:[%s139 + $0x48] sm:$0xf]
      %v167 = vld [vmem:[%s139 + $0x4c] sm:$0xf]
      %v168 = vld [vmem:[%s139 + $0x50] sm:$0xf]
      %v169 = vld [vmem:[%s139 + $0x54] sm:$0xf]
      %v170 = vld [vmem:[%s139 + $0x58] sm:$0xf]
      %v171 = vld [vmem:[%s139 + $0x5c] sm:$0xf]
      %v172 = vld [vmem:[%s139 + $0x60] sm:$0xf]
      %v173 = vld [vmem:[%s139 + $0x64] sm:$0xf]
      %v174 = vld [vmem:[%s139 + $0x68] sm:$0xf]
      %v175 = vld [vmem:[%s139 + $0x6c] sm:$0xf]
      %v176 = vld [vmem:[%s139 + $0x70] sm:$0xf]
      %v177 = vld [vmem:[%s139 + $0x74] sm:$0xf]
      %v178 = vld [vmem:[%s139 + $0x78] sm:$0xf]
      %v179 = vld [vmem:[%s139 + $0x7c] sm:$0xf]
      %v180 = vld [vmem:[%s1] sm:$0xf]
      %v181 = vld [vmem:[%s1 + $0x4] sm:$0xf]
      %v182 = vld [vmem:[%s1 + $0x8] sm:$0xf]
      %v183 = vld [vmem:[%s1 + $0xc] sm:$0xf]
      %v184 = vld [vmem:[%s1 + $0x10] sm:$0xf]
      %v185 = vld [vmem:[%s1 + $0x14] sm:$0xf]
      %v186 = vld [vmem:[%s1 + $0x18] sm:$0xf]
      %v187 = vld [vmem:[%s1 + $0x1c] sm:$0xf]
      %v188 = vld [vmem:[%s1 + $0x20] sm:$0xf]
      %v189 = vld [vmem:[%s1 + $0x24] sm:$0xf]
      %v190 = vld [vmem:[%s1 + $0x28] sm:$0xf]
      %v191 = vld [vmem:[%s1 + $0x2c] sm:$0xf]
      %v192 = vld [vmem:[%s1 + $0x30] sm:$0x3]
      %v225 = vunpack.c.l.b16 %v148
      %v226 = vunpack.c.l.b16 %v149
      %v227 = vunpack.c.l.b16 %v150
      %v228 = vunpack.c.l.b16 %v151
      %v229 = vunpack.c.l.b16 %v152
      %v230 = vunpack.c.l.b16 %v153
      %v231 = vunpack.c.l.b16 %v154
      %v232 = vunpack.c.l.b16 %v155
      %v233 = vunpack.c.l.b16 %v156
      %v234 = vunpack.c.l.b16 %v157
      %v235 = vunpack.c.l.b16 %v158
      %v236 = vunpack.c.l.b16 %v159
      %v237 = vunpack.c.l.b16 %v160
      %v238 = vunpack.c.l.b16 %v161
      %v239 = vunpack.c.l.b16 %v162
      %v240 = vunpack.c.l.b16 %v163
      %v241 = vunpack.c.l.b16 %v164
      %v242 = vunpack.c.l.b16 %v165
      %v243 = vunpack.c.l.b16 %v166
      %v244 = vunpack.c.l.b16 %v167
      %v245 = vunpack.c.l.b16 %v168
      %v246 = vunpack.c.l.b16 %v169
      %v247 = vunpack.c.l.b16 %v170
      %v248 = vunpack.c.l.b16 %v171
      %v249 = vunpack.c.l.b16 %v172
      %v250 = vunpack.c.l.b16 %v173
      %v251 = vunpack.c.l.b16 %v174
      %v252 = vunpack.c.l.b16 %v175
      %v253 = vunpack.c.l.b16 %v176
      %v254 = vunpack.c.l.b16 %v177
      %v255 = vunpack.c.l.b16 %v178
      %v256 = vunpack.c.l.b16 %v179
      %v257 = vpack.c.b16 %v226, %v225
      %v258 = vpack.c.b16 %v228, %v227
      %v259 = vpack.c.b16 %v230, %v229
      %v260 = vpack.c.b16 %v232, %v231
      %v261 = vpack.c.b16 %v234, %v233
      %v262 = vpack.c.b16 %v236, %v235
      %v263 = vpack.c.b16 %v238, %v237
      %v264 = vpack.c.b16 %v240, %v239
      %v265 = vpack.c.b16 %v242, %v241
      %v266 = vpack.c.b16 %v244, %v243
      %v267 = vpack.c.b16 %v246, %v245
      %v268 = vpack.c.b16 %v248, %v247
      %v269 = vpack.c.b16 %v250, %v249
      %v270 = vpack.c.b16 %v252, %v251
      %v271 = vpack.c.b16 %v254, %v253
      %v272 = vpack.c.b16 %v256, %v255
      %v286 = vunpack.c.l.b16 %v180
      %v287 = vunpack.c.l.b16 %v181
      %v288 = vunpack.c.l.b16 %v182
      %v289 = vunpack.c.l.b16 %v183
      %v290 = vunpack.c.l.b16 %v184
      %v291 = vunpack.c.l.b16 %v185
      %v292 = vunpack.c.l.b16 %v186
      %v293 = vunpack.c.l.b16 %v187
      %v294 = vunpack.c.l.b16 %v188
      %v295 = vunpack.c.l.b16 %v189
      %v296 = vunpack.c.l.b16 %v190
      %v297 = vunpack.c.l.b16 %v191
      %v298 = vunpack.c.l.b16 %v192
      %v299 = vpack.c.b16 %v287, %v286
      %v300 = vpack.c.b16 %v289, %v288
      %v301 = vpack.c.b16 %v291, %v290
      %v302 = vpack.c.b16 %v293, %v292
      %v303 = vpack.c.b16 %v295, %v294
      %v304 = vpack.c.b16 %v297, %v296
      %v305 = vpack.c.b16 %v298, %v298
      %vm312 = vcmask 818176
      %v314 = vsel %vm312, %v257, 0
      %v317 = vsel %vm312, %v258, 0
      %v320 = vsel %vm312, %v259, 0
      %v323 = vsel %vm312, %v260, 0
      %v326 = vsel %vm312, %v261, 0
      %v329 = vsel %vm312, %v262, 0
      %v332 = vsel %vm312, %v263, 0
      %v335 = vsel %vm312, %v264, 0
      %v338 = vsel %vm312, %v265, 0
      %v341 = vsel %vm312, %v266, 0
      %v344 = vsel %vm312, %v267, 0
      %v347 = vsel %vm312, %v268, 0
      %v350 = vsel %vm312, %v269, 0
      %v353 = vsel %vm312, %v270, 0
      %v356 = vsel %vm312, %v271, 0
      %v359 = vsel %vm312, %v272, 0
      %vm361 = vcmask 1041408
      %v363 = vsel %vm361, %v305, 0
      %365 = vmatpush.bf16.msra.mxu0 0
      %366 = vmatpush.bf16.msra.mxu0 %v363
      %367 = vmatpush.bf16.msra.mxu0 %v304
      %368 = vmatpush.bf16.msra.mxu0 %v303
      %369 = vmatpush.bf16.msra.mxu0 %v302
      %370 = vmatpush.bf16.msra.mxu0 %v301
      %371 = vmatpush.bf16.msra.mxu0 %v300
      %372 = vmatpush.bf16.msra.mxu0 %v299
      %373 = vmatmul.bf16.gmra.mxu0 %v314
      %v374 = vpop.f32.mrf.mxu0
      %v375 = vadd.f32 0.0, %v374
      %v376 = vpop.f32.mrf.mxu0
      %v377 = vadd.f32 0.0, %v376
      %378 = vmatmul.bf16.gmra.mxu0 %v317
      %v379 = vpop.f32.mrf.mxu0
      %v380 = vadd.f32 0.0, %v379
      %v381 = vpop.f32.mrf.mxu0
      %v382 = vadd.f32 0.0, %v381
      %383 = vmatmul.bf16.gmra.mxu0 %v320
      %v384 = vpop.f32.mrf.mxu0
      %v385 = vadd.f32 0.0, %v384
      %v386 = vpop.f32.mrf.mxu0
      %v387 = vadd.f32 0.0, %v386
      %388 = vmatmul.bf16.gmra.mxu0 %v323
      %v389 = vpop.f32.mrf.mxu0
      %v390 = vadd.f32 0.0, %v389
      %v391 = vpop.f32.mrf.mxu0
      %v392 = vadd.f32 0.0, %v391
      %393 = vmatmul.bf16.gmra.mxu0 %v326
      %v394 = vpop.f32.mrf.mxu0
      %v395 = vadd.f32 0.0, %v394
      %v396 = vpop.f32.mrf.mxu0
      %v397 = vadd.f32 0.0, %v396
      %398 = vmatmul.bf16.gmra.mxu0 %v329
      %v399 = vpop.f32.mrf.mxu0
      %v400 = vadd.f32 0.0, %v399
      %v401 = vpop.f32.mrf.mxu0
      %v402 = vadd.f32 0.0, %v401
      %403 = vmatmul.bf16.gmra.mxu0 %v332
      %v404 = vpop.f32.mrf.mxu0
      %v405 = vadd.f32 0.0, %v404
      %v406 = vpop.f32.mrf.mxu0
      %v407 = vadd.f32 0.0, %v406
      %408 = vmatmul.bf16.gmra.mxu0 %v335
      %v409 = vpop.f32.mrf.mxu0
      %v410 = vadd.f32 0.0, %v409
      %v411 = vpop.f32.mrf.mxu0
      %v412 = vadd.f32 0.0, %v411
      %413 = vmatmul.bf16.gmra.mxu0 %v338
      %v414 = vpop.f32.mrf.mxu0
      %v415 = vadd.f32 0.0, %v414
      %v416 = vpop.f32.mrf.mxu0
      %v417 = vadd.f32 0.0, %v416
      %418 = vmatmul.bf16.gmra.mxu0 %v341
      %v419 = vpop.f32.mrf.mxu0
      %v420 = vadd.f32 0.0, %v419
      %v421 = vpop.f32.mrf.mxu0
      %v422 = vadd.f32 0.0, %v421
      %423 = vmatmul.bf16.gmra.mxu0 %v344
      %v424 = vpop.f32.mrf.mxu0
      %v425 = vadd.f32 0.0, %v424
      %v426 = vpop.f32.mrf.mxu0
      %v427 = vadd.f32 0.0, %v426
      %428 = vmatmul.bf16.gmra.mxu0 %v347
      %v429 = vpop.f32.mrf.mxu0
      %v430 = vadd.f32 0.0, %v429
      %v431 = vpop.f32.mrf.mxu0
      %v432 = vadd.f32 0.0, %v431
      %433 = vmatmul.bf16.gmra.mxu0 %v350
      %v434 = vpop.f32.mrf.mxu0
      %v435 = vadd.f32 0.0, %v434
      %v436 = vpop.f32.mrf.mxu0
      %v437 = vadd.f32 0.0, %v436
      %438 = vmatmul.bf16.gmra.mxu0 %v353
      %v439 = vpop.f32.mrf.mxu0
      %v440 = vadd.f32 0.0, %v439
      %v441 = vpop.f32.mrf.mxu0
      %v442 = vadd.f32 0.0, %v441
      %443 = vmatmul.bf16.gmra.mxu0 %v356
      %v444 = vpop.f32.mrf.mxu0
      %v445 = vadd.f32 0.0, %v444
      %v446 = vpop.f32.mrf.mxu0
      %v447 = vadd.f32 0.0, %v446
      %448 = vmatmul.bf16.gmra.mxu0 %v359
      %v449 = vpop.f32.mrf.mxu0
      %v450 = vadd.f32 0.0, %v449
      %v451 = vpop.f32.mrf.mxu0
      %v452 = vadd.f32 0.0, %v451
      %453 = vdwg.mxu0
      %v454 = vpack.c.bf16 %v375, %v375
      %v455 = vpack.c.bf16 %v377, %v377
      %v456 = vpack.c.bf16 %v380, %v380
      %v457 = vpack.c.bf16 %v382, %v382
      %v458 = vpack.c.bf16 %v385, %v385
      %v459 = vpack.c.bf16 %v387, %v387
      %v460 = vpack.c.bf16 %v390, %v390
      %v461 = vpack.c.bf16 %v392, %v392
      %v462 = vpack.c.bf16 %v395, %v395
      %v463 = vpack.c.bf16 %v397, %v397
      %v464 = vpack.c.bf16 %v400, %v400
      %v465 = vpack.c.bf16 %v402, %v402
      %v466 = vpack.c.bf16 %v405, %v405
      %v467 = vpack.c.bf16 %v407, %v407
      %v468 = vpack.c.bf16 %v410, %v410
      %v469 = vpack.c.bf16 %v412, %v412
      %v470 = vpack.c.bf16 %v415, %v415
      %v471 = vpack.c.bf16 %v417, %v417
      %v472 = vpack.c.bf16 %v420, %v420
      %v473 = vpack.c.bf16 %v422, %v422
      %v474 = vpack.c.bf16 %v425, %v425
      %v475 = vpack.c.bf16 %v427, %v427
      %v476 = vpack.c.bf16 %v430, %v430
      %v477 = vpack.c.bf16 %v432, %v432
      %v478 = vpack.c.bf16 %v435, %v435
      %v479 = vpack.c.bf16 %v437, %v437
      %v480 = vpack.c.bf16 %v440, %v440
      %v481 = vpack.c.bf16 %v442, %v442
      %v482 = vpack.c.bf16 %v445, %v445
      %v483 = vpack.c.bf16 %v447, %v447
      %v484 = vpack.c.bf16 %v450, %v450
      %v485 = vpack.c.bf16 %v452, %v452
      %vm486 = vcmask 338944
      %487 = vst.msk [vmem:[%s145] sm:$0xf] %vm486, %v454
      %488 = vst.msk [vmem:[%s145 + $0x4] sm:$0xf] %vm486, %v455
      %489 = vst.msk [vmem:[%s145 + $0x8] sm:$0xf] %vm486, %v456
      %490 = vst.msk [vmem:[%s145 + $0xc] sm:$0xf] %vm486, %v457
      %491 = vst.msk [vmem:[%s145 + $0x10] sm:$0xf] %vm486, %v458
      %492 = vst.msk [vmem:[%s145 + $0x14] sm:$0xf] %vm486, %v459
      %493 = vst.msk [vmem:[%s145 + $0x18] sm:$0xf] %vm486, %v460
      %494 = vst.msk [vmem:[%s145 + $0x1c] sm:$0xf] %vm486, %v461
      %495 = vst.msk [vmem:[%s145 + $0x20] sm:$0xf] %vm486, %v462
      %496 = vst.msk [vmem:[%s145 + $0x24] sm:$0xf] %vm486, %v463
      %497 = vst.msk [vmem:[%s145 + $0x28] sm:$0xf] %vm486, %v464
      %498 = vst.msk [vmem:[%s145 + $0x2c] sm:$0xf] %vm486, %v465
      %499 = vst.msk [vmem:[%s145 + $0x30] sm:$0xf] %vm486, %v466
      %500 = vst.msk [vmem:[%s145 + $0x34] sm:$0xf] %vm486, %v467
      %501 = vst.msk [vmem:[%s145 + $0x38] sm:$0xf] %vm486, %v468
      %502 = vst.msk [vmem:[%s145 + $0x3c] sm:$0xf] %vm486, %v469
      %503 = vst.msk [vmem:[%s145 + $0x40] sm:$0xf] %vm486, %v470
      %504 = vst.msk [vmem:[%s145 + $0x44] sm:$0xf] %vm486, %v471
      %505 = vst.msk [vmem:[%s145 + $0x48] sm:$0xf] %vm486, %v472
      %506 = vst.msk [vmem:[%s145 + $0x4c] sm:$0xf] %vm486, %v473
      %507 = vst.msk [vmem:[%s145 + $0x50] sm:$0xf] %vm486, %v474
      %508 = vst.msk [vmem:[%s145 + $0x54] sm:$0xf] %vm486, %v475
      %509 = vst.msk [vmem:[%s145 + $0x58] sm:$0xf] %vm486, %v476
      %510 = vst.msk [vmem:[%s145 + $0x5c] sm:$0xf] %vm486, %v477
      %511 = vst.msk [vmem:[%s145 + $0x60] sm:$0xf] %vm486, %v478
      %512 = vst.msk [vmem:[%s145 + $0x64] sm:$0xf] %vm486, %v479
      %513 = vst.msk [vmem:[%s145 + $0x68] sm:$0xf] %vm486, %v480
      %514 = vst.msk [vmem:[%s145 + $0x6c] sm:$0xf] %vm486, %v481
      %515 = vst.msk [vmem:[%s145 + $0x70] sm:$0xf] %vm486, %v482
      %516 = vst.msk [vmem:[%s145 + $0x74] sm:$0xf] %vm486, %v483
      %517 = vst.msk [vmem:[%s145 + $0x78] sm:$0xf] %vm486, %v484
      %518 = vst.msk [vmem:[%s145 + $0x7c] sm:$0xf] %vm486, %v485
      %s519 = smul.u32 32, %s13
      %p520 = scmp.lt.s32.totalorder %s519, 63
      %s521 = scalar_select %p520, %s519, 63
      %s522 = smul.addr %s521, 4
      %s523 = scalar_lea.vmem %s2, %s522
      // Predicated region
      $region29: #{tpu_custom_call.1} parent=27 // pred_check
        %p524 = pneg %p78
      $region30: #{tpu_custom_call.1} parent=27 // pred_check_branch
        %526 = sbr.rel (%p524) target = $region32
      $region31: #{tpu_custom_call.1} parent=27 // pred_region
        %s527 = smul.u32 32, %s13
      $region32: #{tpu_custom_call.1} parent=27 // pred_fallthru
        _
    $region28: #{tpu_custom_call.1} parent=5 // pred_fallthru
      _
    %p528 = scmp.le.s32.totalorder 2, %s8
    // Predicated region
    $region33: #{tpu_custom_call.1} parent=5 // pred_check
      %p529 = pneg %p528
    $region34: #{tpu_custom_call.1} parent=5 // pred_check_branch
      %531 = sbr.rel (%p529) target = $region36
    $region35: #{tpu_custom_call.1} parent=5 // pred_region
      %s532 = ssub.s32 %s8, 2
      // Predicated region
      $region37: #{tpu_custom_call.1} parent=35 // pred_check
        %p533 = pneg %p84
      $region38: #{tpu_custom_call.1} parent=35 // pred_check_branch
        %535 = sbr.rel (%p533) target = $region40
      $region39: #{tpu_custom_call.1} parent=35 // pred_region
        %s536 = smul.u32 32, %s14
        %p537 = scmp.lt.s32.totalorder %s536, 63
        %s538 = scalar_select %p537, %s536, 63
        %s539 = smul.addr %s538, 4
        %s540 = scalar_lea.vmem %s2, %s539
      $region40: #{tpu_custom_call.1} parent=35 // pred_fallthru
        _
    $region36: #{tpu_custom_call.1} parent=5 // pred_fallthru
      _
  $region6: #{tpu_custom_call.1} parent=0 // loop_footer
    %s12 = sadd.s32 1, %s8
  $region7: #{tpu_custom_call.1} parent=0 // loop_footer_branch
    %7 = sbr.rel target = $region3
  $region8: #{tpu_custom_call.1} parent=0 // loop_exit
    _

</llo_original>
